<compile_context>
chip_gen: v6e
topology: v6e:2x2x1
jax: 0.10.0
libtpu: 0.0.40
codegen_flags: <defaults>
</compile_context>

<pallas_src>
import jax
import jax.numpy as jnp
from jax.experimental import pallas as pl
from jax.experimental.pallas import tpu as pltpu


def _attention_kernel(enc_ref, dec_ref, w_enc_ref, w_dec_ref, scal_ref, out_ref):
    # enc_ref:   (S, Bt, 2E)  VMEM, native (src_len, batch, feat) layout
    # dec_ref:   (Bt, D_dec)  VMEM, decoder hidden rows for this batch tile
    # w_enc_ref: (1, 1, 2E)   VMEM, encoder half of the attn weight row
    # w_dec_ref: (1, D_dec)   VMEM, decoder half of the attn weight row
    # scal_ref:  (2,)         SMEM: [W_v scalar, b_attn scalar] (b_v cancels in softmax)
    # out_ref:   (Bt, S)      VMEM, lane-dense softmax output
    enc = enc_ref[...].astype(jnp.float32)                    # per-tile upcast, f32 accumulation
    pre_sb = jnp.sum(enc * w_enc_ref[...], axis=-1)           # VPU mul + lane reduce -> (S, Bt)
    pre = jnp.transpose(pre_sb)                               # small XLU transpose -> (Bt, S)

    dec_bias = jnp.sum(dec_ref[...].astype(jnp.float32) * w_dec_ref[...],
                       axis=-1, keepdims=True) + scal_ref[1]  # (Bt, 1): dec.W_dec + b_attn

    logits = jnp.tanh(pre + dec_bias) * scal_ref[0]           # (Bt, S); tanh on EUP

    m = jnp.max(logits, axis=-1, keepdims=True)               # lane-axis, numerically stable
    e = jnp.exp(logits - m)
    s = jnp.sum(e, axis=-1, keepdims=True)
    r = pl.reciprocal(s, approx=True)                         # EUP vrcp (free slot)
    r = r * (2.0 - s * r)                                     # one Newton step -> ~f32 exact
    out_ref[...] = (e * r).astype(out_ref.dtype)


def _round_up(x, m):
    return -(-x // m) * m


def _step_vmem_bytes(bt, S, E2, D_dec, enc_itemsize):
    """Padded-layout VMEM footprint of one grid step (double-buffered)."""
    bt_p = _round_up(bt, 8)                                   # sublane padding
    enc = S * bt_p * _round_up(E2, 128) * enc_itemsize        # (S, Bt, 2E) block
    dec = bt_p * _round_up(D_dec, 128) * 4                    # (Bt, D_dec) block
    out = bt_p * _round_up(S, 128) * 4                        # (Bt, S) block
    return 2 * (enc + dec) + 2 * out                          # double-buffered in/out


def _pick_batch_tile(B, S, E2, D_dec, enc_itemsize, vmem_budget=40 << 20):
    """Largest batch tile whose padded, double-buffered blocks fit the budget.
    Prefers an even grid length >= 2 (both v7x TensorCores busy), then >= 2
    steps, then the largest fitting tile. Never returns the full batch as a
    blind fallback."""
    if B <= 8:
        return B
    max_bt = _round_up(B, 8)
    fitting = [bt for bt in range(8, max_bt + 1, 8)
               if _step_vmem_bytes(bt, S, E2, D_dec, enc_itemsize) <= vmem_budget]
    if not fitting:
        # TODO(synk): if even an 8-row tile overflows VMEM (huge S*2E), split
        # src_len onto a second grid axis with an online-softmax accumulator.
        return 8
    steps = lambda bt: pl.cdiv(B, bt)
    even = [bt for bt in fitting if steps(bt) >= 2 and steps(bt) % 2 == 0]
    if even:
        return max(even)
    multi = [bt for bt in fitting if steps(bt) >= 2]
    if multi:
        return max(multi)
    return max(fitting)


def attention_forward(decoder_hidden, encoder_outputs, params):
    W_attn, b_attn, W_v, b_v = params      # (A, attn_in), (A,), (A, 1), (A,)
    B, D_dec = decoder_hidden.shape
    S, B2, E2 = encoder_outputs.shape
    A, attn_in = W_attn.shape
    assert B == B2 and attn_in == D_dec + E2
    assert A == 1, "nn.Linear(1, attn_dim) chained after attn requires attn_dim == 1"

    # Tiny, src_len-invariant parameter prep (no per-element HBM passes over enc).
    w_dec = W_attn[:, :D_dec].astype(jnp.float32)                 # (1, D_dec)
    w_enc = W_attn[:, D_dec:].reshape(1, 1, E2).astype(jnp.float32)  # (1, 1, 2E)
    scalars = jnp.stack([W_v[0, 0], b_attn[0]]).astype(jnp.float32)  # (2,) SMEM
    # b_v is constant across src_len -> cancels in softmax -> dropped.

    enc_itemsize = jnp.dtype(encoder_outputs.dtype).itemsize
    Bt = _pick_batch_tile(B, S, E2, D_dec, enc_itemsize)
    grid = (pl.cdiv(B, Bt),)

    out = pl.pallas_call(
        _attention_kernel,
        out_shape=jax.ShapeDtypeStruct((B, S), jnp.float32),
        grid_spec=pltpu.PrefetchScalarGridSpec(
            num_scalar_prefetch=0,
            grid=grid,
            in_specs=[
                pl.BlockSpec((S, Bt, E2), lambda b: (0, b, 0)),     # enc, native layout/dtype
                pl.BlockSpec((Bt, D_dec), lambda b: (b, 0)),        # decoder hidden rows
                pl.BlockSpec((1, 1, E2), lambda b: (0, 0, 0)),      # w_enc
                pl.BlockSpec((1, D_dec), lambda b: (0, 0)),         # w_dec
                pl.BlockSpec(memory_space=pltpu.MemorySpace.SMEM),  # [v_w, b_attn]
            ],
            out_specs=pl.BlockSpec((Bt, S), lambda b: (b, 0)),
        ),
        compiler_params=pltpu.CompilerParams(
            dimension_semantics=("parallel",),
            vmem_limit_bytes=48 << 20),        # > v5e/v6e defaults, < v7x 64 MiB physical
    )(encoder_outputs, decoder_hidden, w_enc, w_dec, scalars)
    return out                                                      # (B, S)


def _reference(decoder_hidden, encoder_outputs, params):
    # Pure-JAX mirror of the PyTorch forward, for correctness checking.
    W_attn, b_attn, W_v, b_v = params
    S = encoder_outputs.shape[0]
    rep = jnp.repeat(decoder_hidden[:, None, :], S, axis=1)
    enc = jnp.transpose(encoder_outputs, (1, 0, 2))
    cat = jnp.concatenate([rep, enc], axis=2)
    t = jnp.tanh(cat @ W_attn.T + b_attn)
    energy = t @ W_v.T + b_v
    att = jnp.sum(energy, axis=2)
    return jax.nn.softmax(att, axis=1)


if __name__ == "__main__":
    enc_hid_dim = 16
    dec_hid_dim = 32
    attn_dim = 1          # required for the PyTorch module to be runnable
    B = 2
    src_len = 8
    attn_in = enc_hid_dim * 2 + dec_hid_dim

    key = jax.random.PRNGKey(0)
    k1, k2, k3, k4, k5, k6 = jax.random.split(key, 6)

    # Parameters (deterministic, same shapes as the nn.Linear layers).
    W_attn = 0.1 * jax.random.normal(k1, (attn_dim, attn_in), jnp.float32)
    b_attn = 0.1 * jax.random.normal(k2, (attn_dim,), jnp.float32)
    W_v = 0.1 * jax.random.normal(k3, (attn_dim, 1), jnp.float32)
    b_v = 0.1 * jax.random.normal(k4, (attn_dim,), jnp.float32)
    params = (W_attn, b_attn, W_v, b_v)

    decoder_hidden = jax.random.normal(k5, (B, dec_hid_dim), jnp.float32)
    encoder_outputs = jax.random.normal(k6, (src_len, B, 2 * enc_hid_dim),
                                        jnp.float32)

    out = attention_forward(decoder_hidden, encoder_outputs, params)
    out = jax.block_until_ready(out)

    ref = _reference(decoder_hidden, encoder_outputs, params)
    assert out.shape == (B, src_len)
    assert jnp.allclose(out, ref, atol=1e-5, rtol=1e-5), "mismatch vs reference"
    print("KERNEL_OK")
</pallas_src>

<mosaic_0001>
module attributes {stable_mosaic.version = 11 : i64} {
  func.func @_attention_kernel(%arg0: i32, %arg1: memref<8x2x32xf32, #tpu.memory_space<vmem>>, %arg2: memref<2x32xf32, #tpu.memory_space<vmem>>, %arg3: memref<1x1x32xf32, #tpu.memory_space<vmem>>, %arg4: memref<1x32xf32, #tpu.memory_space<vmem>>, %arg5: memref<2xf32, #tpu.memory_space<smem>>, %arg6: memref<2x8xf32, #tpu.memory_space<vmem>>) attributes {dimension_semantics = [#tpu.dimension_semantics<parallel>], iteration_bounds = array<i64: 1>, scalar_prefetch = 0 : i64, scratch_operands = 0 : i64, tpu.core_type = #tpu.core_type<tc>, window_params = [{transform_indices = @transform_0, window_bounds = array<i64: 8, 2, 32>}, {transform_indices = @transform_1, window_bounds = array<i64: 2, 32>}, {pipeline_mode = #tpu.pipeline_mode<synchronous>, transform_indices = @transform_2, window_bounds = array<i64: 1, 1, 32>}, {pipeline_mode = #tpu.pipeline_mode<synchronous>, transform_indices = @transform_3, window_bounds = array<i64: 1, 32>}, {transform_indices = @transform_4, window_bounds = array<i64: 2>}, {transform_indices = @transform_5, window_bounds = array<i64: 2, 8>}]} {
    %c0 = arith.constant 0 : index
    %c0_0 = arith.constant 0 : index
    %c0_1 = arith.constant 0 : index
    %0 = vector.load %arg1[%c0, %c0_0, %c0_1] : memref<8x2x32xf32, #tpu.memory_space<vmem>>, vector<8x2x32xf32>
    %c0_2 = arith.constant 0 : index
    %c0_3 = arith.constant 0 : index
    %c0_4 = arith.constant 0 : index
    %1 = vector.load %arg3[%c0_2, %c0_3, %c0_4] : memref<1x1x32xf32, #tpu.memory_space<vmem>>, vector<1x1x32xf32>
    %2 = vector.broadcast %1 : vector<1x1x32xf32> to vector<8x2x32xf32>
    %3 = arith.mulf %0, %2 : vector<8x2x32xf32>
    %cst = arith.constant dense<0.000000e+00> : vector<8x2xf32>
    %4 = vector.multi_reduction <add>, %3, %cst [2] : vector<8x2x32xf32> to vector<8x2xf32>
    %5 = tpu.transpose %4, [1, 0] : vector<8x2xf32> -> vector<2x8xf32>
    %c0_5 = arith.constant 0 : index
    %c0_6 = arith.constant 0 : index
    %6 = vector.load %arg2[%c0_5, %c0_6] : memref<2x32xf32, #tpu.memory_space<vmem>>, vector<2x32xf32>
    %c0_7 = arith.constant 0 : index
    %c0_8 = arith.constant 0 : index
    %7 = vector.load %arg4[%c0_7, %c0_8] : memref<1x32xf32, #tpu.memory_space<vmem>>, vector<1x32xf32>
    %8 = vector.broadcast %7 : vector<1x32xf32> to vector<2x32xf32>
    %9 = arith.mulf %6, %8 : vector<2x32xf32>
    %cst_9 = arith.constant dense<0.000000e+00> : vector<2xf32>
    %10 = vector.multi_reduction <add>, %9, %cst_9 [1] : vector<2x32xf32> to vector<2xf32>
    %11 = vector.shape_cast %10 : vector<2xf32> to vector<2x1xf32>
    %c1 = arith.constant 1 : index
    %12 = memref.load %arg5[%c1] : memref<2xf32, #tpu.memory_space<smem>>
    %13 = vector.broadcast %12 : f32 to vector<2x1xf32>
    %14 = arith.addf %11, %13 : vector<2x1xf32>
    %15 = vector.broadcast %14 : vector<2x1xf32> to vector<2x8xf32>
    %16 = arith.addf %5, %15 : vector<2x8xf32>
    %17 = math.tanh %16 : vector<2x8xf32>
    %c0_10 = arith.constant 0 : index
    %18 = memref.load %arg5[%c0_10] : memref<2xf32, #tpu.memory_space<smem>>
    %19 = vector.broadcast %18 : f32 to vector<2x8xf32>
    %20 = arith.mulf %17, %19 : vector<2x8xf32>
    %cst_11 = arith.constant dense<0xFF800000> : vector<2xf32>
    %21 = vector.multi_reduction <maximumf>, %20, %cst_11 [1] : vector<2x8xf32> to vector<2xf32>
    %22 = vector.shape_cast %21 : vector<2xf32> to vector<2x1xf32>
    %23 = vector.broadcast %22 : vector<2x1xf32> to vector<2x8xf32>
    %24 = arith.subf %20, %23 : vector<2x8xf32>
    %25 = math.exp %24 : vector<2x8xf32>
    %cst_12 = arith.constant dense<0.000000e+00> : vector<2xf32>
    %26 = vector.multi_reduction <add>, %25, %cst_12 [1] : vector<2x8xf32> to vector<2xf32>
    %27 = vector.shape_cast %26 : vector<2xf32> to vector<2x1xf32>
    %28 = tpu.reciprocal %27 {approx = true} : vector<2x1xf32> -> vector<2x1xf32>
    %29 = arith.mulf %27, %28 : vector<2x1xf32>
    %cst_13 = arith.constant 2.000000e+00 : f32
    %30 = vector.broadcast %cst_13 : f32 to vector<2x1xf32>
    %31 = arith.subf %30, %29 : vector<2x1xf32>
    %32 = arith.mulf %28, %31 : vector<2x1xf32>
    %33 = vector.broadcast %32 : vector<2x1xf32> to vector<2x8xf32>
    %34 = arith.mulf %25, %33 : vector<2x8xf32>
    %c0_14 = arith.constant 0 : index
    %c0_15 = arith.constant 0 : index
    %35 = vector.load %arg6[%c0_14, %c0_15] : memref<2x8xf32, #tpu.memory_space<vmem>>, vector<2x8xf32>
    tpu.vector_store %arg6[%c0_14, %c0_15], %34 {strides = array<i32>} : memref<2x8xf32, #tpu.memory_space<vmem>>, vector<2x8xf32>,
    return
  }
  func.func @transform_0(%arg0: i32) -> (i32, i32, i32) {
    %c0_i32 = arith.constant 0 : i32
    %c0_i32_0 = arith.constant 0 : i32
    %c0_i32_1 = arith.constant 0 : i32
    return %c0_i32, %arg0, %c0_i32_0 : i32, i32, i32
  }
  func.func @transform_1(%arg0: i32) -> (i32, i32) {
    %c0_i32 = arith.constant 0 : i32
    %c0_i32_0 = arith.constant 0 : i32
    return %arg0, %c0_i32 : i32, i32
  }
  func.func @transform_2(%arg0: i32) -> (i32, i32, i32) {
    %c0_i32 = arith.constant 0 : i32
    %c0_i32_0 = arith.constant 0 : i32
    %c0_i32_1 = arith.constant 0 : i32
    %c0_i32_2 = arith.constant 0 : i32
    return %c0_i32, %c0_i32_0, %c0_i32_1 : i32, i32, i32
  }
  func.func @transform_3(%arg0: i32) -> (i32, i32) {
    %c0_i32 = arith.constant 0 : i32
    %c0_i32_0 = arith.constant 0 : i32
    %c0_i32_1 = arith.constant 0 : i32
    return %c0_i32, %c0_i32_0 : i32, i32
  }
  func.func @transform_4(%arg0: i32) -> i32 {
    %c0_i32 = arith.constant 0 : i32
    %c0_i32_0 = arith.constant 0 : i32
    return %c0_i32 : i32
  }
  func.func @transform_5(%arg0: i32) -> (i32, i32) {
    %c0_i32 = arith.constant 0 : i32
    %c0_i32_0 = arith.constant 0 : i32
    return %arg0, %c0_i32 : i32, i32
  }
}

</mosaic_0001>

<llo_original>
// kernel: tpu_custom_call.1
$region0: #{tpu_custom_call.1}
  #allocation0 [shape = 'u32[]', space=smem, size = 0x4, offset = 0x4, fixed_abs, tag = 'smem constant byte address 0x4 - core index']
  #allocation1 [shape = 'u32[144,128]{1,0:T(1,128)}', space=vmem, size = 0x12000, scoped, tag = 'internal scratch']
  %s0 = inlined_call_operand.hbm [shape: f32[8,2,32], index: 0, kind: input, shape index: {}]
  %s1 = inlined_call_operand.hbm [shape: f32[2,32], index: 1, kind: input, shape index: {}]
  %s2 = inlined_call_operand.vmem [shape: f32[1,1,32], index: 2, kind: input, shape index: {}]
  %s3 = inlined_call_operand.vmem [shape: f32[1,32], index: 3, kind: input, shape index: {}]
  %s4 = inlined_call_operand.vmem [shape: f32[2], index: 4, kind: input, shape index: {}]
  %s5 = inlined_call_operand.hbm [shape: f32[2,8], index: 5, kind: output, shape index: {}]
  %s6 = sld [smem:[#allocation0]]
  $region42: #{tpu_custom_call.1} parent=0
    _
  %s8 = ssub.s32 1, %s6
  %s9 = scalar_select 0, %s8, %s6
  $region1: #{tpu_custom_call.1} parent=0
    #allocation2 [shape = 'u8[8192]{0}', space=vmem, size = 0x2000, scoped, tag = 'input window, operand 0, single buffered']
    #allocation3 [shape = 's32[1]{0}', space=sflag, size = 0x4, scoped, tag = 'scoped memory for tpu_custom_call.1']
    #allocation4 [shape = 's32[1]{0}', space=sflag, size = 0x4, scoped, tag = 'scoped memory for tpu_custom_call.1']
    #allocation5 [shape = 's32[1]{0}', space=sflag, size = 0x4, scoped, tag = 'scoped memory for tpu_custom_call.1']
    #allocation6 [shape = 'u8[1024]{0}', space=vmem, size = 0x400, scoped, tag = 'input window, operand 1, single buffered']
    #allocation7 [shape = 's32[1]{0}', space=sflag, size = 0x4, scoped, tag = 'scoped memory for tpu_custom_call.1']
    #allocation8 [shape = 'u8[512]{0}', space=smem, size = 0x200, scoped, tag = 'input window, operand 4, single buffered']
    #allocation9 [shape = 'u8[1024]{0}', space=vmem, size = 0x400, scoped, tag = 'output window, operand 0, single buffered']
    %10 = vsyncpa [#allocation3], 0
    %11 = vsyncpa [#allocation7], 0
    %12 = vsyncpa [#allocation5], 0
    %13 = vsyncpa [#allocation4], 0
    // Predicated region
    $region2: #{tpu_custom_call.1} parent=1 // pred_check
      _
    $region3: #{tpu_custom_call.1} parent=1 // pred_check_branch
      %15 = sbr.rel (0) target = $region5
    $region4: #{tpu_custom_call.1} parent=1 // pred_region
      %s17 = ssub.s32 256, 256
      %18 = vsyncadd [#allocation3], %s17
      %s19 = sshll.u32 [#allocation2], 4
      %s20 = int_to_ptr.vmem [resolvable:$true] %s19
      %25 = dma.hbm_to_vmem [thread:$0]  %s0, 256, %s20, [#allocation3], 32, 32, 2
    $region5: #{tpu_custom_call.1} parent=1 // pred_fallthru
      _
    // Predicated region
    $region6: #{tpu_custom_call.1} parent=1 // pred_check
      _
    $region7: #{tpu_custom_call.1} parent=1 // pred_check_branch
      %27 = sbr.rel (0) target = $region9
    $region8: #{tpu_custom_call.1} parent=1 // pred_region
      %s29 = ssub.s32 32, 32
      %30 = vsyncadd [#allocation7], %s29
      %s32 = sshll.u32 [#allocation6], 4
      %s33 = int_to_ptr.vmem [resolvable:$true] %s32
      %35 = dma.hbm_to_vmem [thread:$0]  %s1, 32, %s33, [#allocation7]
    $region9: #{tpu_custom_call.1} parent=1 // pred_fallthru
      _
    // Predicated region
    $region10: #{tpu_custom_call.1} parent=1 // pred_check
      _
    $region11: #{tpu_custom_call.1} parent=1 // pred_check_branch
      %37 = sbr.rel (0) target = $region13
    $region12: #{tpu_custom_call.1} parent=1 // pred_region
      _
    $region13: #{tpu_custom_call.1} parent=1 // pred_fallthru
      _
    // Predicated region
    $region14: #{tpu_custom_call.1} parent=1 // pred_check
      _
    $region15: #{tpu_custom_call.1} parent=1 // pred_check_branch
      %39 = sbr.rel (0) target = $region17
    $region16: #{tpu_custom_call.1} parent=1 // pred_region
      _
    $region17: #{tpu_custom_call.1} parent=1 // pred_fallthru
      _
    // Predicated region
    $region18: #{tpu_custom_call.1} parent=1 // pred_check
      _
    $region19: #{tpu_custom_call.1} parent=1 // pred_check_branch
      %41 = sbr.rel (0) target = $region21
    $region20: #{tpu_custom_call.1} parent=1 // pred_region
      %s43 = ssub.s32 16, 16
      %44 = vsyncadd [#allocation5], %s43
      %s46 = sshll.u32 %s4, 4
      %s47 = int_to_ptr.vmem [resolvable:$true] %s46
      %49 = dma.vmem_to_smem %s47, 16, [#allocation8], [#allocation5]
    $region21: #{tpu_custom_call.1} parent=1 // pred_fallthru
      _
    // Predicated region
    $region22: #{tpu_custom_call.1} parent=1 // pred_check
      _
    $region23: #{tpu_custom_call.1} parent=1 // pred_check_branch
      %51 = sbr.rel (0) target = $region25
    $region24: #{tpu_custom_call.1} parent=1 // pred_region
      %52 = dma.done [#allocation3], 256
    $region25: #{tpu_custom_call.1} parent=1 // pred_fallthru
      _
    // Predicated region
    $region26: #{tpu_custom_call.1} parent=1 // pred_check
      _
    $region27: #{tpu_custom_call.1} parent=1 // pred_check_branch
      %54 = sbr.rel (0) target = $region29
    $region28: #{tpu_custom_call.1} parent=1 // pred_region
      %55 = dma.done [#allocation7], 32
    $region29: #{tpu_custom_call.1} parent=1 // pred_fallthru
      _
    // Predicated region
    $region30: #{tpu_custom_call.1} parent=1 // pred_check
      _
    $region31: #{tpu_custom_call.1} parent=1 // pred_check_branch
      %57 = sbr.rel (0) target = $region33
    $region32: #{tpu_custom_call.1} parent=1 // pred_region
      %58 = dma.done [#allocation5], 16
    $region33: #{tpu_custom_call.1} parent=1 // pred_fallthru
      _
    %59 = sfence
    %v60 = vld [vmem:[#allocation2] sm:$0x3]
    %v61 = vld [vmem:[#allocation2 + $0x2] sm:$0x3]
    %v62 = vld [vmem:[#allocation2 + $0x4] sm:$0x3]
    %v63 = vld [vmem:[#allocation2 + $0x6] sm:$0x3]
    %v64 = vld [vmem:[#allocation2 + $0x8] sm:$0x3]
    %v65 = vld [vmem:[#allocation2 + $0xa] sm:$0x3]
    %v66 = vld [vmem:[#allocation2 + $0xc] sm:$0x3]
    %v67 = vld [vmem:[#allocation2 + $0xe] sm:$0x3]
    %v68 = vld [vmem:[%s2] sm:$0x1]
    %v70 = vlaneseq
    %v71 = vshrl.u32 %v70, 7
    %v72 = vsub.s32 0, %v71
    %v73 = vrot.slane %v68, %v72
    %v75 = vmul.f32 %v60, %v73
    %v76 = vmul.f32 %v61, %v73
    %v77 = vmul.f32 %v62, %v73
    %v78 = vmul.f32 %v63, %v73
    %v79 = vmul.f32 %v64, %v73
    %v80 = vmul.f32 %v65, %v73
    %v81 = vmul.f32 %v66, %v73
    %v82 = vmul.f32 %v67, %v73
    %vm83 = vcmask 254976
    %v84 = vsel %vm83, %v75, 0.0
    %85 = vadd.xlane.f32.xlu0 %v84
    %v86 = vpop.xlane.xlu0 %85
    %v87 = vsel %vm83, %v76, 0.0
    %88 = vadd.xlane.f32.xlu0 %v87
    %v89 = vpop.xlane.xlu0 %88
    %v90 = vsel %vm83, %v77, 0.0
    %91 = vadd.xlane.f32.xlu0 %v90
    %v92 = vpop.xlane.xlu0 %91
    %v93 = vsel %vm83, %v78, 0.0
    %94 = vadd.xlane.f32.xlu0 %v93
    %v95 = vpop.xlane.xlu0 %94
    %v96 = vsel %vm83, %v79, 0.0
    %97 = vadd.xlane.f32.xlu0 %v96
    %v98 = vpop.xlane.xlu0 %97
    %v99 = vsel %vm83, %v80, 0.0
    %100 = vadd.xlane.f32.xlu0 %v99
    %v101 = vpop.xlane.xlu0 %100
    %v102 = vsel %vm83, %v81, 0.0
    %103 = vadd.xlane.f32.xlu0 %v102
    %v104 = vpop.xlane.xlu0 %103
    %v105 = vsel %vm83, %v82, 0.0
    %106 = vadd.xlane.f32.xlu0 %v105
    %v107 = vpop.xlane.xlu0 %106
    %v116 = vlaneseq
    %v117 = vand.u32 %v116, 127
    %v118 = vlaneseq
    %v119 = vshrl.u32 %v118, 7
    %v120 = vsub.s32 %v117, %v119
    %v121 = vrot.slane %v86, %v120
    %v122 = vlaneseq
    %v123 = vshrl.u32 %v122, 7
    %v124 = vsub.s32 %v117, %v123
    %v125 = vrot.slane %v89, %v124
    %v126 = vlaneseq
    %v127 = vshrl.u32 %v126, 7
    %v128 = vsub.s32 %v117, %v127
    %v129 = vrot.slane %v92, %v128
    %v130 = vlaneseq
    %v131 = vshrl.u32 %v130, 7
    %v132 = vsub.s32 %v117, %v131
    %v133 = vrot.slane %v95, %v132
    %v134 = vlaneseq
    %v135 = vshrl.u32 %v134, 7
    %v136 = vsub.s32 %v117, %v135
    %v137 = vrot.slane %v98, %v136
    %v138 = vlaneseq
    %v139 = vshrl.u32 %v138, 7
    %v140 = vsub.s32 %v117, %v139
    %v141 = vrot.slane %v101, %v140
    %v142 = vlaneseq
    %v143 = vshrl.u32 %v142, 7
    %v144 = vsub.s32 %v117, %v143
    %v145 = vrot.slane %v104, %v144
    %v146 = vlaneseq
    %v147 = vshrl.u32 %v146, 7
    %v148 = vsub.s32 %v117, %v147
    %v149 = vrot.slane %v107, %v148
    %vm150 = vcmask 1041409
    %v151 = vsel %vm150, %v125, %v121
    %vm152 = vcmask 1042434
    %v153 = vsel %vm152, %v129, %v151
    %vm154 = vcmask 1043459
    %v155 = vsel %vm154, %v133, %v153
    %vm156 = vcmask 1044484
    %v157 = vsel %vm156, %v137, %v155
    %vm158 = vcmask 1045509
    %v159 = vsel %vm158, %v141, %v157
    %vm160 = vcmask 1046534
    %v161 = vsel %vm160, %v145, %v159
    %vm162 = vcmask 1047559
    %v163 = vsel %vm162, %v149, %v161
    %165 = vxpose.xlu0.b32.start [1/16] %v163, 128
    %166 = vxpose.xlu0.b32.cont [2/16] 0.0, 128
    %167 = vxpose.xlu0.b32.cont [3/16] 0.0, 128
    %168 = vxpose.xlu0.b32.cont [4/16] 0.0, 128
    %169 = vxpose.xlu0.b32.cont [5/16] 0.0, 128
    %170 = vxpose.xlu0.b32.cont [6/16] 0.0, 128
    %171 = vxpose.xlu0.b32.cont [7/16] 0.0, 128
    %172 = vxpose.xlu0.b32.cont [8/16] 0.0, 128
    %173 = vxpose.xlu0.b32.cont [9/16] 0.0, 128
    %174 = vxpose.xlu0.b32.cont [10/16] 0.0, 128
    %175 = vxpose.xlu0.b32.cont [11/16] 0.0, 128
    %176 = vxpose.xlu0.b32.cont [12/16] 0.0, 128
    %177 = vxpose.xlu0.b32.cont [13/16] 0.0, 128
    %178 = vxpose.xlu0.b32.cont [14/16] 0.0, 128
    %179 = vxpose.xlu0.b32.cont [15/16] 0.0, 128
    %180 = vxpose.xlu0.b32.end [16/16] 0.0, 128
    %v181 = vpop.trf.xlu0
    %v182 = vpop.trf.xlu0
    %v183 = vpop.trf.xlu0
    %v184 = vpop.trf.xlu0
    %v185 = vpop.trf.xlu0
    %v186 = vpop.trf.xlu0
    %v187 = vpop.trf.xlu0
    %v188 = vpop.trf.xlu0
    %v189 = vpop.trf.xlu0
    %v190 = vpop.trf.xlu0
    %v191 = vpop.trf.xlu0
    %v192 = vpop.trf.xlu0
    %v193 = vpop.trf.xlu0
    %v194 = vpop.trf.xlu0
    %v195 = vpop.trf.xlu0
    %v196 = vpop.trf.xlu0
    %v197 = vld [vmem:[#allocation6] sm:$0x3]
    %v198 = vld [vmem:[%s3] sm:$0x1]
    %v200 = vlaneseq
    %v201 = vshrl.u32 %v200, 7
    %v202 = vsub.s32 0, %v201
    %v203 = vrot.slane %v198, %v202
    %v205 = vmul.f32 %v197, %v203
    %v206 = vsel %vm83, %v205, 0.0
    %207 = vadd.xlane.f32.xlu0 %v206
    %v208 = vpop.xlane.xlu0 %207
    %s209 = sld [smem:[#allocation8 + $0x1]]
    %v210 = vstv %s209
    %v211 = vadd.f32 %v208, %v210
    %v212 = vadd.f32 %v181, %v211
    %v213 = vtanh.pop %v212
    %s214 = sld [smem:[#allocation8]]
    %v215 = vstv %s214
    %v216 = vmul.f32 %v213, %v215
    %vm217 = vcmask 58368
    %v218 = vsel %vm217, %v216, -inf
    %219 = vmax.xlane.f32.xlu0 %v218
    %v220 = vpop.xlane.xlu0 %219
    %v221 = vsub.f32 %v216, %v220
    %v222 = vmul.f32 %v221, 1.442695
    %v223 = vpow.pop %v222
    %v224 = vsel %vm217, %v223, 0.0
    %225 = vadd.xlane.f32.xlu0 %v224
    %v226 = vpop.xlane.xlu0 %225
    %v227 = vrcp.pop %v226
    %v228 = vmul.f32 %v226, %v227
    %v229 = vsub.f32 2.0, %v228
    %v230 = vmul.f32 %v227, %v229
    %v231 = vmul.f32 %v223, %v230
    %232 = vst.msk [vmem:[#allocation9] sm:$0x3] %vm217, %v231
    // Predicated region
    $region34: #{tpu_custom_call.1} parent=1 // pred_check
      _
    $region35: #{tpu_custom_call.1} parent=1 // pred_check_branch
      %234 = sbr.rel (0) target = $region37
    $region36: #{tpu_custom_call.1} parent=1 // pred_region
      %s236 = ssub.s32 32, 32
      %237 = vsyncadd [#allocation4], %s236
      %s239 = sshll.u32 [#allocation9], 4
      %s240 = int_to_ptr.vmem [resolvable:$true] %s239
      %242 = dma.vmem_to_hbm [thread:$0]  %s240, 32, %s5, [#allocation4]
    $region37: #{tpu_custom_call.1} parent=1 // pred_fallthru
      _
    // Predicated region
    $region38: #{tpu_custom_call.1} parent=1 // pred_check
      _
    $region39: #{tpu_custom_call.1} parent=1 // pred_check_branch
      %244 = sbr.rel (0) target = $region41
    $region40: #{tpu_custom_call.1} parent=1 // pred_region
      %245 = dma.done [#allocation4], 32
    $region41: #{tpu_custom_call.1} parent=1 // pred_fallthru
      _
    %246 = vsyncpa [#allocation3], 1
    %247 = vsyncpa [#allocation7], 1
    %248 = vsyncpa [#allocation4], 1
    %249 = vsyncpa [#allocation5], 1

</llo_original>
